<compile_context>
chip_gen: v7x
topology: tpu7x:2x2x1
jax: 0.10.0
libtpu: 0.0.40
codegen_flags: <defaults>
</compile_context>

<pallas_src>
import functools

import jax
import jax.numpy as jnp
from jax.experimental import pallas as pl
from jax.experimental.pallas import tpu as pltpu


def _round_up(a, b):
    return ((a + b - 1) // b) * b


def pem_kernel(xt_ref, w1t_ref, b1t_ref, w2_ref, b2_ref, o_ref):
    # xt_ref : (FEAT, TILE_N)   -- feature-major tile of proposals (lane-dense)
    # w1t_ref: (HIDDEN, FEAT)   -- fc1 weight^T, pre-scaled by 0.1 (VMEM resident)
    # b1t_ref: (HIDDEN, 1)      -- 0.1 * fc1 bias, f32
    # w2_ref : (HIDDEN, 1)      -- 0.1 * fc2 weight, f32
    # b2_ref : (1, 1)           -- 0.1 * fc2 bias, f32
    # o_ref  : (1, TILE_N)      -- lane-dense output row for this tile
    # fc1 (MXU): h[hid, n] = sum_f (0.1*w1)[f, hid] * x[n, f]
    h = jnp.dot(w1t_ref[...], xt_ref[...], preferred_element_type=jnp.float32)
    h = jnp.maximum(h + b1t_ref[...], 0.0)                     # (HIDDEN, TILE_N) f32

    # fc2: weighted sum over the small hidden (sublane) axis -> (1, TILE_N).
    y = jnp.sum(h * w2_ref[...], axis=0, keepdims=True) + b2_ref[...]
    o_ref[...] = jax.nn.sigmoid(y).astype(o_ref.dtype)


@functools.partial(jax.jit, static_argnames=("tile_n",))
def pem_forward(x_fm, w1, b1, w2, b2, *, tile_n=32768):
    """Optimized PEM forward.

    x_fm : (feat, N) feature-major proposal features (lane-dense layout; the
           producer should emit/store x this way — do NOT transpose a row-major
           x here, that re-reads the dominant operand).
    w1   : (feat, hidden);  b1: (1, hidden);  w2: (hidden, 1);  b2: (1, 1)
    Returns (N,) f32 scores == sigmoid(0.1*fc2(relu(0.1*fc1(x)))) per proposal.
    """
    feat, n = x_fm.shape
    hidden = w1.shape[1]
    assert tile_n % 128 == 0

    # Effective tile: multiple of 128 (lane-dense), no bigger than needed.
    # Per-generation guidance: 32768 (f32) -> 8 MiB x double buffer, fits the
    # default scoped VMEM everywhere (v5e 16 MiB, v6e/v7x 32 MiB); sweep up to
    # 65536 with vmem_limit_bytes on v6e if profiling warrants it.
    tile = min(tile_n, _round_up(n, 128))
    grid_n = pl.cdiv(n, tile)
    n_pad = grid_n * tile

    # Fold both 0.1 scales into the (tiny) weights/biases once, in f32; cast the
    # MXU operand back to the streaming dtype.  relu(0.1*(x@w1+b1)) ==
    # relu(x@(0.1*w1)+0.1*b1), and likewise for fc2 — identical up to ulps.
    w1t = (jnp.transpose(w1).astype(jnp.float32) * 0.1).astype(x_fm.dtype)   # (hidden, feat)
    b1t = jnp.reshape(b1, (hidden, 1)).astype(jnp.float32) * 0.1
    w2c = jnp.reshape(w2, (hidden, 1)).astype(jnp.float32) * 0.1
    b2c = jnp.reshape(b2, (1, 1)).astype(jnp.float32) * 0.1

    cost = pl.CostEstimate(
        flops=2 * n * feat * hidden + 4 * n * hidden,
        transcendentals=n,                                      # sigmoid exp
        bytes_accessed=feat * n_pad * x_fm.dtype.itemsize       # streamed x tiles
                       + n_pad * 4                              # lane-dense output row
                       + w1.size * w1.dtype.itemsize,
    )

    out = pl.pallas_call(
        pem_kernel,
        out_shape=jax.ShapeDtypeStruct((1, n_pad), jnp.float32),
        grid_spec=pltpu.PrefetchScalarGridSpec(
            num_scalar_prefetch=0,
            grid=(grid_n,),
            in_specs=[
                pl.BlockSpec((feat, tile), lambda i: (0, i)),     # x tile (pipelined)
                pl.BlockSpec((hidden, feat), lambda i: (0, 0)),   # 0.1 * w1^T
                pl.BlockSpec((hidden, 1), lambda i: (0, 0)),      # 0.1 * b1^T
                pl.BlockSpec((hidden, 1), lambda i: (0, 0)),      # 0.1 * w2
                pl.BlockSpec((1, 1), lambda i: (0, 0)),           # 0.1 * b2
            ],
            out_specs=pl.BlockSpec((1, tile), lambda i: (0, i)),  # lane-dense row
        ),
        compiler_params=pltpu.CompilerParams(
            dimension_semantics=("parallel",),                    # megacore on v7x
        ),
        cost_estimate=cost,
    )(x_fm, w1t, b1t, w2c, b2c)

    # Lane-dense (1, n_pad) -> (N,).  The last partial block's pad lanes carry
    # garbage, so keep this slice (or mask downstream) — never drop it silently.
    # Consumers that need the PyTorch (N, 1) shape can add the axis lazily.
    return out[0, :n]


def pem_forward_rowmajor(x, w1, b1, w2, b2, *, tile_n=32768):
    """Drop-in wrapper matching the PyTorch contract exactly: x (N, feat) ->
    (N, 1).  NOTE: this adds a transpose of x plus a lane-padded (N, 1) write;
    prefer producing x feature-major and calling pem_forward directly."""
    return pem_forward(jnp.transpose(x), w1, b1, w2, b2, tile_n=tile_n)[:, None]


def pem_reference(x, w1, b1, w2, b2):
    h = jnp.maximum(0.1 * (x @ w1 + b1), 0.0)
    return jax.nn.sigmoid(0.1 * (h @ w2 + b2))


if __name__ == "__main__":
    # Small shapes consistent with the module: pem_feat_dim=32, pem_hidden_dim=16,
    # output_dim=1.  N=300 proposals with tile_n=128 exercises a multi-step grid
    # including a partial last block.
    N, FEAT_DIM, HIDDEN_DIM = 300, 32, 16

    key = jax.random.PRNGKey(0)
    kx, kw1, kb1, kw2, kb2 = jax.random.split(key, 5)

    x = jax.random.normal(kx, (N, FEAT_DIM), dtype=jnp.float32)   # module-contract layout
    w1 = jax.random.normal(kw1, (FEAT_DIM, HIDDEN_DIM), dtype=jnp.float32) * 0.1
    b1 = jax.random.normal(kb1, (1, HIDDEN_DIM), dtype=jnp.float32) * 0.1
    w2 = jax.random.normal(kw2, (HIDDEN_DIM, 1), dtype=jnp.float32) * 0.1
    b2 = jax.random.normal(kb2, (1, 1), dtype=jnp.float32) * 0.1

    ref = pem_reference(x, w1, b1, w2, b2)                        # (N, 1)

    # Producer-side layout: proposal features stored feature-major (feat, N) so
    # the kernel's x reads are lane-dense.  (Done here once at input creation,
    # not inside the hot wrapper.)
    x_fm = jnp.asarray(x.T)

    # f32 path (bit-faithful to the PyTorch module up to ulps from scale folding).
    out = pem_forward(x_fm, w1, b1, w2, b2, tile_n=128)
    out = jax.block_until_ready(out)
    assert out.shape == (N,)
    assert jnp.allclose(out, ref[:, 0], atol=1e-5, rtol=1e-5)

    # bf16 streaming (halves HBM bytes); accumulation + relu/sigmoid stay f32 in
    # the kernel, so only a small deviation from the f32 reference.
    bf = jnp.bfloat16
    out_bf16 = pem_forward(x_fm.astype(bf), w1.astype(bf), b1.astype(bf),
                           w2.astype(bf), b2.astype(bf), tile_n=128)
    out_bf16 = jax.block_until_ready(out_bf16)
    assert out_bf16.shape == (N,)
    assert jnp.allclose(out_bf16, ref[:, 0], atol=2e-2)

    # Drop-in (N, feat) -> (N, 1) contract check (convenience path only).
    out_rm = pem_forward_rowmajor(x, w1, b1, w2, b2, tile_n=128)
    out_rm = jax.block_until_ready(out_rm)
    assert out_rm.shape == (N, 1)
    assert jnp.allclose(out_rm, ref, atol=1e-5, rtol=1e-5)

    print("KERNEL_OK")
</pallas_src>

<mosaic_0001>
module attributes {stable_mosaic.version = 11 : i64} {
  func.func @pem_kernel(%arg0: i32, %arg1: memref<32x128xf32, #tpu.memory_space<vmem>>, %arg2: memref<16x32xf32, #tpu.memory_space<vmem>>, %arg3: memref<16x1xf32, #tpu.memory_space<vmem>>, %arg4: memref<16x1xf32, #tpu.memory_space<vmem>>, %arg5: memref<1x1xf32, #tpu.memory_space<vmem>>, %arg6: memref<1x128xf32, #tpu.memory_space<vmem>>) attributes {dimension_semantics = [#tpu.dimension_semantics<parallel>], iteration_bounds = array<i64: 3>, scalar_prefetch = 0 : i64, scratch_operands = 0 : i64, tpu.core_type = #tpu.core_type<tc>, window_params = [{transform_indices = @transform_0, window_bounds = array<i64: 32, 128>}, {pipeline_mode = #tpu.pipeline_mode<synchronous>, transform_indices = @transform_1, window_bounds = array<i64: 16, 32>}, {pipeline_mode = #tpu.pipeline_mode<synchronous>, transform_indices = @transform_2, window_bounds = array<i64: 16, 1>}, {pipeline_mode = #tpu.pipeline_mode<synchronous>, transform_indices = @transform_3, window_bounds = array<i64: 16, 1>}, {pipeline_mode = #tpu.pipeline_mode<synchronous>, transform_indices = @transform_4, window_bounds = array<i64: 1, 1>}, {transform_indices = @transform_5, window_bounds = array<i64: 1, 128>}]} {
    %c0 = arith.constant 0 : index
    %c0_0 = arith.constant 0 : index
    %0 = vector.load %arg2[%c0, %c0_0] : memref<16x32xf32, #tpu.memory_space<vmem>>, vector<16x32xf32>
    %c0_1 = arith.constant 0 : index
    %c0_2 = arith.constant 0 : index
    %1 = vector.load %arg1[%c0_1, %c0_2] : memref<32x128xf32, #tpu.memory_space<vmem>>, vector<32x128xf32>
    %cst = arith.constant dense<0.000000e+00> : vector<16x128xf32>
    %2 = tpu.matmul %0, %1, %cst {dimension_numbers = #tpu.dot_dimension_numbers<[1], [0], [0], [1], [0, 0, 1, 1], [], []>} : vector<16x32xf32>, vector<32x128xf32>, vector<16x128xf32> -> vector<16x128xf32>
    %c0_3 = arith.constant 0 : index
    %c0_4 = arith.constant 0 : index
    %3 = vector.load %arg3[%c0_3, %c0_4] : memref<16x1xf32, #tpu.memory_space<vmem>>, vector<16x1xf32>
    %4 = vector.broadcast %3 : vector<16x1xf32> to vector<16x128xf32>
    %5 = arith.addf %2, %4 : vector<16x128xf32>
    %cst_5 = arith.constant 0.000000e+00 : f32
    %6 = vector.broadcast %cst_5 : f32 to vector<16x128xf32>
    %7 = arith.maximumf %5, %6 : vector<16x128xf32>
    %c0_6 = arith.constant 0 : index
    %c0_7 = arith.constant 0 : index
    %8 = vector.load %arg4[%c0_6, %c0_7] : memref<16x1xf32, #tpu.memory_space<vmem>>, vector<16x1xf32>
    %9 = vector.broadcast %8 : vector<16x1xf32> to vector<16x128xf32>
    %10 = arith.mulf %7, %9 : vector<16x128xf32>
    %cst_8 = arith.constant dense<0.000000e+00> : vector<128xf32>
    %11 = vector.multi_reduction <add>, %10, %cst_8 [0] : vector<16x128xf32> to vector<128xf32>
    %12 = vector.shape_cast %11 : vector<128xf32> to vector<1x128xf32>
    %c0_9 = arith.constant 0 : index
    %c0_10 = arith.constant 0 : index
    %13 = vector.load %arg5[%c0_9, %c0_10] : memref<1x1xf32, #tpu.memory_space<vmem>>, vector<1x1xf32>
    %14 = vector.broadcast %13 : vector<1x1xf32> to vector<1x128xf32>
    %15 = arith.addf %12, %14 : vector<1x128xf32>
    %16 = arith.negf %15 : vector<1x128xf32>
    %17 = math.exp %16 : vector<1x128xf32>
    %cst_11 = arith.constant 1.000000e+00 : f32
    %18 = vector.broadcast %cst_11 : f32 to vector<1x128xf32>
    %19 = arith.addf %18, %17 : vector<1x128xf32>
    %20 = arith.divf %18, %19 : vector<1x128xf32>
    %c0_12 = arith.constant 0 : index
    %c0_13 = arith.constant 0 : index
    %21 = vector.load %arg6[%c0_12, %c0_13] : memref<1x128xf32, #tpu.memory_space<vmem>>, vector<1x128xf32>
    tpu.vector_store %arg6[%c0_12, %c0_13], %20 {strides = array<i32>} : memref<1x128xf32, #tpu.memory_space<vmem>>, vector<1x128xf32>,
    return
  }
  func.func @transform_0(%arg0: i32) -> (i32, i32) {
    %c0_i32 = arith.constant 0 : i32
    %c0_i32_0 = arith.constant 0 : i32
    return %c0_i32, %arg0 : i32, i32
  }
  func.func @transform_1(%arg0: i32) -> (i32, i32) {
    %c0_i32 = arith.constant 0 : i32
    %c0_i32_0 = arith.constant 0 : i32
    %c0_i32_1 = arith.constant 0 : i32
    return %c0_i32, %c0_i32_0 : i32, i32
  }
  func.func @transform_2(%arg0: i32) -> (i32, i32) {
    %c0_i32 = arith.constant 0 : i32
    %c0_i32_0 = arith.constant 0 : i32
    %c0_i32_1 = arith.constant 0 : i32
    return %c0_i32, %c0_i32_0 : i32, i32
  }
  func.func @transform_3(%arg0: i32) -> (i32, i32) {
    %c0_i32 = arith.constant 0 : i32
    %c0_i32_0 = arith.constant 0 : i32
    %c0_i32_1 = arith.constant 0 : i32
    return %c0_i32, %c0_i32_0 : i32, i32
  }
  func.func @transform_4(%arg0: i32) -> (i32, i32) {
    %c0_i32 = arith.constant 0 : i32
    %c0_i32_0 = arith.constant 0 : i32
    %c0_i32_1 = arith.constant 0 : i32
    return %c0_i32, %c0_i32_0 : i32, i32
  }
  func.func @transform_5(%arg0: i32) -> (i32, i32) {
    %c0_i32 = arith.constant 0 : i32
    %c0_i32_0 = arith.constant 0 : i32
    return %c0_i32, %arg0 : i32, i32
  }
}

</mosaic_0001>

<llo_original>
// kernel: pem_forward.1
$region0: #{pem_forward.1}
  #allocation0 [shape = 'u32[]', space=smem, size = 0x4, offset = 0x4, fixed_abs, tag = 'smem constant byte address 0x4 - core index']
  #allocation1 [shape = 'u32[144,128]{1,0:T(1,128)}', space=vmem, size = 0x12000, scoped, tag = 'internal scratch']
  #allocation2 [shape = 'f32[1,1]{1,0:T(1,128)S(1)}', space=vmem, size = 0x200, scoped, tag = 'scoped memory for pem_forward.1']
  %s0 = inlined_call_operand.vmem [shape: f32[32,300], index: 0, kind: input, shape index: {}]
  %s1 = inlined_call_operand.vmem [shape: f32[16,32], index: 1, kind: input, shape index: {}]
  %s2 = inlined_call_operand.vmem [shape: f32[16,1], index: 2, kind: input, shape index: {}]
  %s3 = inlined_call_operand.vmem [shape: f32[16,1], index: 3, kind: input, shape index: {}]
  %s4 = inlined_call_operand.<no memory space> [shape: f32[1,1], index: 4, kind: input, shape index: {}]
  %s5 = inlined_call_operand.vmem [shape: f32[1,384], index: 5, kind: output, shape index: {}]
  %s6 = sld [smem:[#allocation0]]
  $region91: #{pem_forward.1} parent=0
    _
  %s8 = ssub.s32 1, %s6
  %s9 = scalar_select 0, %s8, %s6
  %v10 = vstv %s4
  %11 = vst [vmem:[#allocation2] sm:$0x1] %v10
  $region1: #{pem_forward.1} parent=0
    #allocation3 [shape = 'u8[32768]{0}', space=vmem, size = 0x8000, scoped, tag = 'input window, operand 0']
    loop: start=0, step=1, limit=5
    $region2: #{pem_forward.1} parent=1 // loop_pre_header
      _
    $region3: #{pem_forward.1} parent=1 // loop_header
      %s13 = sphi 0, %s17
      %p14 = scmp.ge.s32.totalorder %s13, 5
      %s23 = sphi 0, %s25
      %s26 = sphi 0, %s23
      %s27 = sphi 0, %s26
      %s43 = sphi 0, %s27
      %s47 = sphi 0, %s47
      %s49 = sphi 0, %s47
      %s50 = sphi 0, %s49
      %s64 = sphi 0, %s50
      %s68 = sphi 0, %s68
      %s70 = sphi 0, %s68
      %s71 = sphi 0, %s70
      %s85 = sphi 0, %s71
      %s89 = sphi 0, %s89
      %s91 = sphi 0, %s89
      %s92 = sphi 0, %s91
      %s106 = sphi 0, %s92
      %s110 = sphi 0, %s110
      %s112 = sphi 0, %s110
      %s113 = sphi 0, %s112
      %s127 = sphi 0, %s113
      %s133 = sphi 0, %s135
      %s136 = sphi 0, %s133
      %s137 = sphi 0, %s136
      %s153 = sphi 0, %s137
    $region4: #{pem_forward.1} parent=1 // loop_header_branch
      %16 = sbr.rel (%p14) target = $region8
    $region5: #{pem_forward.1} parent=1 // loop_body
      %s18 = ssub.s32 %s13, 1
      %s19 = ssub.s32 %s13, 2
      %s20 = sadd.s32 %s13, 1
      %s21 = ssub.s32 %s13, %s20
      %p22 = scmp.eq.s32.totalorder %s21, 0
      %s24 = sadd.s32 %s23, 1
      %s25 = scalar_select %p22, %s23, %s24
      %p28 = pneg %p22
      %p29 = scmp.eq.s32.totalorder %s13, 2
      %p30 = por %p28, %p29
      %p31 = scmp.ne.s32.totalorder %s23, %s26
      %p32 = scmp.eq.s32.totalorder %s13, 0
      %p33 = por %p31, %p32
      %p34 = scmp.ne.s32.totalorder %s23, %s26
      %p35 = scmp.eq.s32.totalorder %s18, 2
      %p36 = por %p34, %p35
      %p37 = scmp.ne.s32.totalorder %s26, %s27
      %p38 = scmp.eq.s32.totalorder %s18, 0
      %p39 = por %p37, %p38
      %p40 = scmp.ne.s32.totalorder %s26, %s27
      %p41 = scmp.eq.s32.totalorder %s19, 2
      %p42 = por %p40, %p41
      %p44 = scmp.ne.s32.totalorder %s27, %s43
      %p45 = scmp.eq.s32.totalorder %s19, 0
      %p46 = por %p44, %p45
      %s48 = sadd.s32 %s47, 1
      %p51 = scmp.eq.s32.totalorder %s13, 2
      %p52 = scmp.ne.s32.totalorder %s47, %s49
      %p53 = scmp.eq.s32.totalorder %s13, 0
      %p54 = por %p52, %p53
      %p55 = scmp.ne.s32.totalorder %s47, %s49
      %p56 = scmp.eq.s32.totalorder %s18, 2
      %p57 = por %p55, %p56
      %p58 = scmp.ne.s32.totalorder %s49, %s50
      %p59 = scmp.eq.s32.totalorder %s18, 0
      %p60 = por %p58, %p59
      %p61 = scmp.ne.s32.totalorder %s49, %s50
      %p62 = scmp.eq.s32.totalorder %s19, 2
      %p63 = por %p61, %p62
      %p65 = scmp.ne.s32.totalorder %s50, %s64
      %p66 = scmp.eq.s32.totalorder %s19, 0
      %p67 = por %p65, %p66
      %s69 = sadd.s32 %s68, 1
      %p72 = scmp.eq.s32.totalorder %s13, 2
      %p73 = scmp.ne.s32.totalorder %s68, %s70
      %p74 = scmp.eq.s32.totalorder %s13, 0
      %p75 = por %p73, %p74
      %p76 = scmp.ne.s32.totalorder %s68, %s70
      %p77 = scmp.eq.s32.totalorder %s18, 2
      %p78 = por %p76, %p77
      %p79 = scmp.ne.s32.totalorder %s70, %s71
      %p80 = scmp.eq.s32.totalorder %s18, 0
      %p81 = por %p79, %p80
      %p82 = scmp.ne.s32.totalorder %s70, %s71
      %p83 = scmp.eq.s32.totalorder %s19, 2
      %p84 = por %p82, %p83
      %p86 = scmp.ne.s32.totalorder %s71, %s85
      %p87 = scmp.eq.s32.totalorder %s19, 0
      %p88 = por %p86, %p87
      %s90 = sadd.s32 %s89, 1
      %p93 = scmp.eq.s32.totalorder %s13, 2
      %p94 = scmp.ne.s32.totalorder %s89, %s91
      %p95 = scmp.eq.s32.totalorder %s13, 0
      %p96 = por %p94, %p95
      %p97 = scmp.ne.s32.totalorder %s89, %s91
      %p98 = scmp.eq.s32.totalorder %s18, 2
      %p99 = por %p97, %p98
      %p100 = scmp.ne.s32.totalorder %s91, %s92
      %p101 = scmp.eq.s32.totalorder %s18, 0
      %p102 = por %p100, %p101
      %p103 = scmp.ne.s32.totalorder %s91, %s92
      %p104 = scmp.eq.s32.totalorder %s19, 2
      %p105 = por %p103, %p104
      %p107 = scmp.ne.s32.totalorder %s92, %s106
      %p108 = scmp.eq.s32.totalorder %s19, 0
      %p109 = por %p107, %p108
      %s111 = sadd.s32 %s110, 1
      %p114 = scmp.eq.s32.totalorder %s13, 2
      %p115 = scmp.ne.s32.totalorder %s110, %s112
      %p116 = scmp.eq.s32.totalorder %s13, 0
      %p117 = por %p115, %p116
      %p118 = scmp.ne.s32.totalorder %s110, %s112
      %p119 = scmp.eq.s32.totalorder %s18, 2
      %p120 = por %p118, %p119
      %p121 = scmp.ne.s32.totalorder %s112, %s113
      %p122 = scmp.eq.s32.totalorder %s18, 0
      %p123 = por %p121, %p122
      %p124 = scmp.ne.s32.totalorder %s112, %s113
      %p125 = scmp.eq.s32.totalorder %s19, 2
      %p126 = por %p124, %p125
      %p128 = scmp.ne.s32.totalorder %s113, %s127
      %p129 = scmp.eq.s32.totalorder %s19, 0
      %p130 = por %p128, %p129
      %s131 = ssub.s32 %s13, %s20
      %p132 = scmp.eq.s32.totalorder %s131, 0
      %s134 = sadd.s32 %s133, 1
      %s135 = scalar_select %p132, %s133, %s134
      %p138 = pneg %p132
      %p139 = scmp.eq.s32.totalorder %s13, 2
      %p140 = por %p138, %p139
      %p141 = scmp.ne.s32.totalorder %s133, %s136
      %p142 = scmp.eq.s32.totalorder %s13, 0
      %p143 = por %p141, %p142
      %p144 = scmp.ne.s32.totalorder %s133, %s136
      %p145 = scmp.eq.s32.totalorder %s18, 2
      %p146 = por %p144, %p145
      %p147 = scmp.ne.s32.totalorder %s136, %s137
      %p148 = scmp.eq.s32.totalorder %s18, 0
      %p149 = por %p147, %p148
      %p150 = scmp.ne.s32.totalorder %s136, %s137
      %p151 = scmp.eq.s32.totalorder %s19, 2
      %p152 = por %p150, %p151
      %p154 = scmp.ne.s32.totalorder %s137, %s153
      %p155 = scmp.eq.s32.totalorder %s19, 0
      %p156 = por %p154, %p155
      %p157 = scmp.le.s32.totalorder 1, %s13
      %p158 = scmp.lt.s32.totalorder %s13, 4
      %p159 = pnand %p157, %p158
      %p160 = pneg %p159
      // Predicated region
      $region9: #{pem_forward.1} parent=5 // pred_check
        _
      $region10: #{pem_forward.1} parent=5 // pred_check_branch
        %162 = sbr.rel (%p159) target = $region12
      $region11: #{pem_forward.1} parent=5 // pred_region
        %s163 = ssub.s32 %s13, 1
        // Predicated region
        $region13: #{pem_forward.1} parent=11 // pred_check
          %p164 = pneg %p60
        $region14: #{pem_forward.1} parent=11 // pred_check_branch
          %166 = sbr.rel (%p164) target = $region16
        $region15: #{pem_forward.1} parent=11 // pred_region
          _
        $region16: #{pem_forward.1} parent=11 // pred_fallthru
          _
        // Predicated region
        $region17: #{pem_forward.1} parent=11 // pred_check
          %p167 = pneg %p81
        $region18: #{pem_forward.1} parent=11 // pred_check_branch
          %169 = sbr.rel (%p167) target = $region20
        $region19: #{pem_forward.1} parent=11 // pred_region
          _
        $region20: #{pem_forward.1} parent=11 // pred_fallthru
          _
        // Predicated region
        $region21: #{pem_forward.1} parent=11 // pred_check
          %p170 = pneg %p102
        $region22: #{pem_forward.1} parent=11 // pred_check_branch
          %172 = sbr.rel (%p170) target = $region24
        $region23: #{pem_forward.1} parent=11 // pred_region
          _
        $region24: #{pem_forward.1} parent=11 // pred_fallthru
          _
        // Predicated region
        $region25: #{pem_forward.1} parent=11 // pred_check
          %p173 = pneg %p123
        $region26: #{pem_forward.1} parent=11 // pred_check_branch
          %175 = sbr.rel (%p173) target = $region28
        $region27: #{pem_forward.1} parent=11 // pred_region
          _
        $region28: #{pem_forward.1} parent=11 // pred_fallthru
          _
      $region12: #{pem_forward.1} parent=5 // pred_fallthru
        _
      %p176 = scmp.lt.s32.totalorder %s13, 3
      // Predicated region
      $region29: #{pem_forward.1} parent=5 // pred_check
        %p177 = pneg %p176
      $region30: #{pem_forward.1} parent=5 // pred_check_branch
        %179 = sbr.rel (%p177) target = $region32
      $region31: #{pem_forward.1} parent=5 // pred_region
        // Predicated region
        $region33: #{pem_forward.1} parent=31 // pred_check
          %p180 = pneg %p33
        $region34: #{pem_forward.1} parent=31 // pred_check_branch
          %182 = sbr.rel (%p180) target = $region36
        $region35: #{pem_forward.1} parent=31 // pred_region
          %s183 = sand.u32 %s23, 1
          %s184 = sand.u32 %s23, 1
          %s185 = smul.addr %s184, 32
          %s186 = scalar_lea.vmem [#allocation3], %s185
          %s187 = smul.addr %s13, 8
          %s188 = scalar_lea.vmem %s0, %s187
          // Predicated region
          $region37: #{pem_forward.1} parent=35 // pred_check
            _
          $region38: #{pem_forward.1} parent=35 // pred_check_branch
            %190 = sbr.rel (0) target = $region40
          $region39: #{pem_forward.1} parent=35 // pred_region
            // Predicated region
            $region41: #{pem_forward.1} parent=39 // pred_check
              _
            $region42: #{pem_forward.1} parent=39 // pred_check_branch
              %192 = sbr.rel (0) target = $region44
            $region43: #{pem_forward.1} parent=39 // pred_region
              // Predicated region
              $region56: #{pem_forward.1} parent=43 // pred_check
                _
              $region57: #{pem_forward.1} parent=43 // pred_check_branch
                %213 = sbr.rel (0) target = $region59
              $region58: #{pem_forward.1} parent=43 // pred_region
                loop: start=0, step=1, limit=1
                $region60: #{pem_forward.1} parent=58 // loop_pre_header
                  _
                $region61: #{pem_forward.1} parent=58 // loop_header
                  %s215 = sphi 0, %s219
                  %p216 = scmp.ge.s32.totalorder %s215, 1
                  %s220 = sphi %s188, %s188
                  %s221 = sphi %s186, %s186
                $region62: #{pem_forward.1} parent=58 // loop_header_branch
                  %218 = sbr.rel (%p216) target = $region66
                $region63: #{pem_forward.1} parent=58 // loop_body
                  %v222 = vld [vmem:[%s220] sm:$0xff]
                  %223 = vst [vmem:[%s221] sm:$0xff] %v222
                  %v224 = vld [vmem:[%s220 + $0x18] sm:$0xff]
                  %225 = vst [vmem:[%s221 + $0x8] sm:$0xff] %v224
                  %v226 = vld [vmem:[%s220 + $0x30] sm:$0xff]
                  %227 = vst [vmem:[%s221 + $0x10] sm:$0xff] %v226
                  %v228 = vld [vmem:[%s220 + $0x48] sm:$0xff]
                  %229 = vst [vmem:[%s221 + $0x18] sm:$0xff] %v228
                $region64: #{pem_forward.1} parent=58 // loop_footer
                  %s219 = sadd.s32 1, %s215
                $region65: #{pem_forward.1} parent=58 // loop_footer_branch
                  %214 = sbr.rel target = $region61
                $region66: #{pem_forward.1} parent=58 // loop_exit
                  _
              $region59: #{pem_forward.1} parent=43 // pred_fallthru
                _
              // Predicated region
              $region67: #{pem_forward.1} parent=43 // pred_check
                _
              $region68: #{pem_forward.1} parent=43 // pred_check_branch
                %231 = sbr.rel target = $region70
              $region69: #{pem_forward.1} parent=43 // pred_region
                _
              $region70: #{pem_forward.1} parent=43 // pred_fallthru
                _
            $region44: #{pem_forward.1} parent=39 // pred_fallthru
              _
            // Predicated region
            $region45: #{pem_forward.1} parent=39 // pred_check
              _
            $region46: #{pem_forward.1} parent=39 // pred_check_branch
              %194 = sbr.rel target = $region48
            $region47: #{pem_forward.1} parent=39 // pred_region
              loop: start=0, step=1, limit=1
              $region49: #{pem_forward.1} parent=47 // loop_pre_header
                _
              $region50: #{pem_forward.1} parent=47 // loop_header
                %s197 = sphi 0, %s201
                %p198 = scmp.ge.s32.totalorder %s197, 1
                %s202 = sphi %s188, %s188
                %s203 = sphi %s186, %s186
              $region51: #{pem_forward.1} parent=47 // loop_header_branch
                %200 = sbr.rel (%p198) target = $region55
              $region52: #{pem_forward.1} parent=47 // loop_body
                %v204 = vld [vmem:[%s202] sm:$0xff]
                %205 = vst [vmem:[%s203] sm:$0xff] %v204
                %v206 = vld [vmem:[%s202 + $0x18] sm:$0xff]
                %207 = vst [vmem:[%s203 + $0x8] sm:$0xff] %v206
                %v208 = vld [vmem:[%s202 + $0x30] sm:$0xff]
                %209 = vst [vmem:[%s203 + $0x10] sm:$0xff] %v208
                %v210 = vld [vmem:[%s202 + $0x48] sm:$0xff]
                %211 = vst [vmem:[%s203 + $0x18] sm:$0xff] %v210
              $region53: #{pem_forward.1} parent=47 // loop_footer
                %s201 = sadd.s32 1, %s197
              $region54: #{pem_forward.1} parent=47 // loop_footer_branch
                %196 = sbr.rel target = $region50
              $region55: #{pem_forward.1} parent=47 // loop_exit
                _
            $region48: #{pem_forward.1} parent=39 // pred_fallthru
              _
          $region40: #{pem_forward.1} parent=35 // pred_fallthru
            _
          %232 = vnop
        $region36: #{pem_forward.1} parent=31 // pred_fallthru
          _
      $region32: #{pem_forward.1} parent=5 // pred_fallthru
        _
      %p233 = scmp.le.s32.totalorder 1, %s13
      %p234 = scmp.lt.s32.totalorder %s13, 4
      %p235 = pnand %p233, %p234
      %p236 = pneg %p235
      // Predicated region
      $region71: #{pem_forward.1} parent=5 // pred_check
        _
      $region72: #{pem_forward.1} parent=5 // pred_check_branch
        %238 = sbr.rel (%p235) target = $region74
      $region73: #{pem_forward.1} parent=5 // pred_region
        %s239 = ssub.s32 %s13, 1
        %s240 = sand.u32 %s26, 1
        %s241 = sand.u32 %s26, 1
        %s242 = smul.addr %s241, 32
        %s243 = scalar_lea.vmem [#allocation3], %s242
        // Predicated region
        $region75: #{pem_forward.1} parent=73 // pred_check
          %p244 = pneg %p39
        $region76: #{pem_forward.1} parent=73 // pred_check_branch
          %246 = sbr.rel (%p244) target = $region78
        $region77: #{pem_forward.1} parent=73 // pred_region
          _
        $region78: #{pem_forward.1} parent=73 // pred_fallthru
          _
        %s247 = sand.u32 %s26, 1
        %s248 = sand.u32 %s26, 1
        %s249 = smul.addr %s248, 32
        %s250 = scalar_lea.vmem [#allocation3], %s249
        %p251 = pneg %p39
        %p252 = pneg %p36
        %p253 = pneg %p60
        %p254 = pneg %p57
        %p255 = pneg %p81
        %p256 = pneg %p78
        %p257 = pneg %p102
        %p258 = pneg %p99
        %p259 = pneg %p123
        %p260 = pneg %p120
        %p261 = pneg %p149
        %p262 = pneg %p146
        %p263 = scmp.lt.s32.totalorder %s18, 2
        %s264 = scalar_select %p263, %s18, 2
        %s265 = scalar_lea.vmem %s5, %s264
        %p266 = scmp.lt.s32.totalorder %s18, 2
        %s267 = scalar_select %p266, %s18, 2
        %s268 = scalar_lea.vmem %s5, %s267
        %v269 = vld [vmem:[%s1] sm:$0xff]
        %v270 = vld [vmem:[%s1 + $0x8] sm:$0xff]
        %v271 = vld [vmem:[%s243] sm:$0xff]
        %v272 = vld [vmem:[%s243 + $0x8] sm:$0xff]
        %v273 = vld [vmem:[%s243 + $0x10] sm:$0xff]
        %v274 = vld [vmem:[%s243 + $0x18] sm:$0xff]
        %v275 = vld [vmem:[%s2] sm:$0xff]
        %v276 = vld [vmem:[%s2 + $0x8] sm:$0xff]
        %278 = vset.pattern.permute.xlu0 0
        %279 = vperm.xlu0 %278, %v275
        %v280 = vpop.permute.xlu0 %279
        %283 = vset.pattern.permute.xlu0 0
        %284 = vperm.xlu0 %283, %v276
        %v285 = vpop.permute.xlu0 %284
        %vm287 = vcmask 261120
        %v289 = vsel %vm287, %v269, 0
        %v292 = vsel %vm287, %v270, 0
        %294 = vmatprep.subr.mxu0 0.0
        %295 = vmatpush1.msra.mxu0 %v271
        %296 = vmatprep.subr.mxu0 0.0
        %297 = vmatpush1.msra.mxu0 %v272
        %298 = vmatprep.subr.mxu0 0.0
        %299 = vmatpush1.msra.mxu0 %v273
        %300 = vmatprep.subr.mxu0 0.0
        %301 = vmatpush1.msra.mxu0 %v274
        %302 = vmatprep.subr.mxu0 0.0
        %303 = vmatpush1.msra.mxu0 0.0
        %304 = vmatprep.subr.mxu0 0.0
        %305 = vmatpush1.msra.mxu0 0.0
        %306 = vmatprep.subr.mxu0 0.0
        %307 = vmatpush1.msra.mxu0 0.0
        %308 = vmatprep.subr.mxu0 0.0
        %309 = vmatpush1.msra.mxu0 0.0
        %310 = vmatprep.subr.mxu0 0.0
        %311 = vmatpush1.msra.mxu0 0.0
        %312 = vmatprep.subr.mxu0 0.0
        %313 = vmatpush1.msra.mxu0 0.0
        %314 = vmatprep.subr.mxu0 0.0
        %315 = vmatpush1.msra.mxu0 0.0
        %316 = vmatprep.subr.mxu0 0.0
        %317 = vmatpush1.msra.mxu0 0.0
        %318 = vmatprep.subr.mxu0 0.0
        %319 = vmatpush1.msra.mxu0 0.0
        %320 = vmatprep.subr.mxu0 0.0
        %321 = vmatpush1.msra.mxu0 0.0
        %322 = vmatprep.subr.mxu0 0.0
        %323 = vmatpush1.msra.mxu0 0.0
        %324 = vmatprep.subr.mxu0 0.0
        %325 = vmatpush1.msra.mxu0 0.0
        %326 = vmatprep.subr.mxu0 0.0
        %327 = vmatpush1.msra.mxu0 0.0
        %328 = vmatprep.subr.mxu0 0.0
        %329 = vmatpush1.msra.mxu0 0.0
        %330 = vmatprep.subr.mxu0 0.0
        %331 = vmatpush1.msra.mxu0 0.0
        %332 = vmatprep.subr.mxu0 0.0
        %333 = vmatpush1.msra.mxu0 0.0
        %334 = vmatprep.subr.mxu0 0.0
        %335 = vmatpush1.msra.mxu0 0.0
        %336 = vmatprep.subr.mxu0 0.0
        %337 = vmatpush1.msra.mxu0 0.0
        %338 = vmatprep.subr.mxu0 0.0
        %339 = vmatpush1.msra.mxu0 0.0
        %340 = vmatprep.subr.mxu0 0.0
        %341 = vmatpush1.msra.mxu0 0.0
        %342 = vmatprep.subr.mxu0 0.0
        %343 = vmatpush1.msra.mxu0 0.0
        %344 = vmatprep.subr.mxu0 0.0
        %345 = vmatpush1.msra.mxu0 0.0
        %346 = vmatprep.subr.mxu0 0.0
        %347 = vmatpush1.msra.mxu0 0.0
        %348 = vmatprep.subr.mxu0 0.0
        %349 = vmatpush1.msra.mxu0 0.0
        %350 = vmatprep.subr.mxu0 0.0
        %351 = vmatpush1.msra.mxu0 0.0
        %352 = vmatprep.subr.mxu0 0.0
        %353 = vmatpush1.msra.mxu0 0.0
        %354 = vmatprep.subr.mxu0 0.0
        %355 = vmatpush1.msra.mxu0 0.0
        %356 = vmatprep.subr.mxu0 0.0
        %357 = vmatpush1.msra.mxu0 0.0
        %358 = vmatprep.mubr.f32.mxu0 0.0
        %359 = vmatmul.mubr.f32.gmra.mrb[0].mxu0 %v289
        %v360 = vpop.f32.mrb[0].mxu0
        %v361 = vadd.f32 %v280, %v360
        %v362 = vpop.f32.mrb[0].mxu0
        %363 = vmatprep.mubr.f32.mxu0 0.0
        %364 = vmatmul.mubr.f32.gmra.mrb[0].mxu0 %v292
        %v365 = vpop.f32.mrb[0].mxu0
        %v366 = vadd.f32 %v285, %v365
        %v367 = vpop.f32.mrb[0].mxu0
        %368 = vdwg.mxu0
        %v369 = vmax.f32 %v361, 0.0
        %v370 = vmax.f32 %v366, 0.0
        %v371 = vld [vmem:[%s3] sm:$0xff]
        %v372 = vld [vmem:[%s3 + $0x8] sm:$0xff]
        %374 = vset.pattern.permute.xlu0 0
        %375 = vperm.xlu0 %374, %v371
        %v376 = vpop.permute.xlu0 %375
        %379 = vset.pattern.permute.xlu0 0
        %380 = vperm.xlu0 %379, %v372
        %v381 = vpop.permute.xlu0 %380
        %v383 = vmul.f32 %v369, %v376
        %v384 = vmul.f32 %v370, %v381
        %v385 = vadd.f32 %v383, %v384
        %v386 = vrot.slane %v385, 4
        %v387 = vadd.f32 %v385, %v386
        %v388 = vrot.slane %v387, 2
        %v389 = vadd.f32 %v387, %v388
        %v390 = vrot.slane %v389, 1
        %v391 = vadd.f32 %v389, %v390
        %v392 = vld [vmem:[#allocation2] sm:$0x1]
        %394 = vset.pattern.permute.xlu0 0
        %395 = vperm.xlu0 %394, %v392
        %v396 = vpop.permute.xlu0 %395
        %v398 = vlaneseq
        %v399 = vshrl.u32 %v398, 7
        %v400 = vsub.s32 0, %v399
        %v401 = vrot.slane %v396, %v400
        %v402 = vadd.f32 %v391, %v401
        %v403 = vxor.u32 %v402, 2147483648
        %v404 = vmul.f32 %v403, 1.442695
        %v405 = vpow.pop %v404
        %v406 = vadd.f32 %v405, 1.0
        %v407 = vrcp.pop %v406
        %v408 = vmul.f32 1.0, %v407
        %409 = vst [vmem:[%s268] sm:$0x1] %v408
        %p410 = scmp.lt.s32.totalorder %s18, 2
        %s411 = scalar_select %p410, %s18, 2
        %s412 = scalar_lea.vmem %s5, %s411
        // Predicated region
        $region79: #{pem_forward.1} parent=73 // pred_check
          %p413 = pneg %p146
        $region80: #{pem_forward.1} parent=73 // pred_check_branch
          %415 = sbr.rel (%p413) target = $region82
        $region81: #{pem_forward.1} parent=73 // pred_region
          _
        $region82: #{pem_forward.1} parent=73 // pred_fallthru
          _
      $region74: #{pem_forward.1} parent=5 // pred_fallthru
        _
      %p416 = scmp.le.s32.totalorder 2, %s13
      // Predicated region
      $region83: #{pem_forward.1} parent=5 // pred_check
        %p417 = pneg %p416
      $region84: #{pem_forward.1} parent=5 // pred_check_branch
        %419 = sbr.rel (%p417) target = $region86
      $region85: #{pem_forward.1} parent=5 // pred_region
        %s420 = ssub.s32 %s13, 2
        // Predicated region
        $region87: #{pem_forward.1} parent=85 // pred_check
          %p421 = pneg %p152
        $region88: #{pem_forward.1} parent=85 // pred_check_branch
          %423 = sbr.rel (%p421) target = $region90
        $region89: #{pem_forward.1} parent=85 // pred_region
          %p424 = scmp.lt.s32.totalorder %s19, 2
          %s425 = scalar_select %p424, %s19, 2
          %s426 = scalar_lea.vmem %s5, %s425
        $region90: #{pem_forward.1} parent=85 // pred_fallthru
          _
      $region86: #{pem_forward.1} parent=5 // pred_fallthru
        _
    $region6: #{pem_forward.1} parent=1 // loop_footer
      %s17 = sadd.s32 1, %s13
    $region7: #{pem_forward.1} parent=1 // loop_footer_branch
      %12 = sbr.rel target = $region3
    $region8: #{pem_forward.1} parent=1 // loop_exit
      _

</llo_original>
